<compile_context>
chip_gen: v7x
topology: tpu7x:2x2x1
jax: 0.10.0
libtpu: 0.0.40
codegen_flags: <defaults>
</compile_context>

<pallas_src>
import jax
import jax.numpy as jnp
from jax.experimental import pallas as pl
from jax.experimental.pallas import tpu as pltpu

_LANE = 128
_MAX_CW = 8192                          # cap on lane-dense slab width
_TILE_BYTES_TARGET = 4 * 1024 * 1024    # ~4 MiB per (TR, CW) tile
_VMEM_LIMIT_BYTES = 40 * 1024 * 1024    # explicit scoped-VMEM budget (all gens)


def _relu_kernel(x_ref, o_ref):
    # Elementwise max(x, 0) on the whole VMEM tile (VPU work only).
    o_ref[...] = jnp.maximum(x_ref[...], jnp.zeros((), x_ref.dtype))


def _packed_sublane(dtype):
    """Sublane multiple for packed layouts: 8 (f32), 16 (bf16/f16), 32 (8-bit)."""
    itemsize = jnp.dtype(dtype).itemsize
    return 8 * max(1, 4 // itemsize)


def _pick_cw(total):
    """Largest multiple of 128 (<= _MAX_CW) that evenly divides `total`."""
    best = None
    m = _LANE
    cap = min(total, _MAX_CW)
    while m <= cap:
        if total % m == 0:
            best = m
        m += _LANE
    return best


def _relu_2d(x2, donate):
    """Run the tiled Pallas ReLU on a lane-dense (R, CW) slab."""
    r, cw = x2.shape
    itemsize = jnp.dtype(x2.dtype).itemsize
    sub = _packed_sublane(x2.dtype)

    # Row tile: ~4 MiB, rounded to the dtype's packed-sublane multiple.
    tr = max(sub, (_TILE_BYTES_TARGET // (cw * itemsize)) // sub * sub)
    if tr >= r:
        tr = r  # full-extent block along rows: always legal
    grid = (pl.cdiv(r, tr),)

    return pl.pallas_call(
        _relu_kernel,
        out_shape=jax.ShapeDtypeStruct((r, cw), x2.dtype),
        grid_spec=pl.GridSpec(
            grid=grid,
            in_specs=[pl.BlockSpec((tr, cw), lambda i: (i, 0))],
            out_specs=pl.BlockSpec((tr, cw), lambda i: (i, 0)),
        ),
        compiler_params=pltpu.CompilerParams(
            dimension_semantics=("parallel",),
            vmem_limit_bytes=_VMEM_LIMIT_BYTES,
        ),
        cost_estimate=pl.CostEstimate(
            flops=r * cw,
            transcendentals=0,
            bytes_accessed=2 * r * cw * itemsize,
        ),
        input_output_aliases=({0: 0} if donate else {}),
    )(x2)


def relu_pallas(x: jax.Array, *, donate: bool = False) -> jax.Array:
    """ReLU (F.relu) as a tiled, lane-dense Pallas TPU kernel. Any shape/dtype.

    Set donate=True only if the caller donates `x` (enables in-place aliasing).
    """
    orig_shape = x.shape
    total = x.size
    if total == 0:
        return x
    if total < _LANE:
        # Tiny input: a single fused XLA elementwise pass is already optimal.
        return jnp.maximum(x, jnp.zeros((), x.dtype))

    flat = x.reshape(total)
    cw = _pick_cw(total)
    if cw is not None:
        # Aligned case (the common one): no pad, no slice — exactly one HBM
        # read + one HBM write.
        out = _relu_2d(flat.reshape(total // cw, cw), donate)
        return out.reshape(orig_shape)

    # Unaligned total (not a multiple of 128): kernel on the aligned prefix,
    # plain jnp.maximum on the (<128 element) tail. Avoids the 2 extra HBM
    # passes a whole-array pad + slice would cost.
    aligned = (total // _LANE) * _LANE
    cw_p = _pick_cw(aligned)
    head = _relu_2d(flat[:aligned].reshape(aligned // cw_p, cw_p), False)
    tail = jnp.maximum(flat[aligned:], jnp.zeros((), x.dtype))
    return jnp.concatenate([head.reshape(aligned), tail]).reshape(orig_shape)


if __name__ == "__main__":
    key = jax.random.PRNGKey(0)

    # Small NCHW input consistent with a generic F.relu forward.
    x = jax.random.normal(key, (2, 4, 16, 16), dtype=jnp.float32)
    y = jax.block_until_ready(relu_pallas(x))
    ref = jnp.maximum(x, 0.0)
    assert y.shape == x.shape and y.dtype == x.dtype
    assert bool(jnp.allclose(y, ref)), "mismatch vs reference ReLU (f32)"

    # Extra robustness checks: bf16 (packed sublanes) and an unaligned total.
    xb = jax.random.normal(key, (2, 3, 16, 16), dtype=jnp.bfloat16)
    yb = jax.block_until_ready(relu_pallas(xb))
    assert bool(jnp.all(yb == jnp.maximum(xb, jnp.zeros((), xb.dtype)))), \
        "mismatch vs reference ReLU (bf16)"

    xu = jax.random.normal(key, (3, 7, 11), dtype=jnp.float32)  # total=231
    yu = jax.block_until_ready(relu_pallas(xu))
    assert bool(jnp.allclose(yu, jnp.maximum(xu, 0.0))), \
        "mismatch vs reference ReLU (unaligned)"

    print("KERNEL_OK")
</pallas_src>

<mosaic_0001>
module attributes {stable_mosaic.version = 11 : i64} {
  func.func @_relu_kernel(%arg0: i32, %arg1: memref<1x2048xf32, #tpu.memory_space<vmem>>, %arg2: memref<1x2048xf32, #tpu.memory_space<vmem>>) attributes {dimension_semantics = [#tpu.dimension_semantics<parallel>], iteration_bounds = array<i64: 1>, scalar_prefetch = 0 : i64, scratch_operands = 0 : i64, tpu.core_type = #tpu.core_type<tc>, window_params = [{transform_indices = @transform_0, window_bounds = array<i64: 1, 2048>}, {transform_indices = @transform_1, window_bounds = array<i64: 1, 2048>}]} {
    %c0 = arith.constant 0 : index
    %c0_0 = arith.constant 0 : index
    %0 = vector.load %arg1[%c0, %c0_0] : memref<1x2048xf32, #tpu.memory_space<vmem>>, vector<1x2048xf32>
    %cst = arith.constant 0.000000e+00 : f32
    %1 = vector.broadcast %cst : f32 to vector<1x2048xf32>
    %2 = arith.maximumf %0, %1 : vector<1x2048xf32>
    %c0_1 = arith.constant 0 : index
    %c0_2 = arith.constant 0 : index
    %3 = vector.load %arg2[%c0_1, %c0_2] : memref<1x2048xf32, #tpu.memory_space<vmem>>, vector<1x2048xf32>
    tpu.vector_store %arg2[%c0_1, %c0_2], %2 {strides = array<i32>} : memref<1x2048xf32, #tpu.memory_space<vmem>>, vector<1x2048xf32>,
    return
  }
  func.func @transform_0(%arg0: i32) -> (i32, i32) {
    %c0_i32 = arith.constant 0 : i32
    %c0_i32_0 = arith.constant 0 : i32
    return %arg0, %c0_i32 : i32, i32
  }
  func.func @transform_1(%arg0: i32) -> (i32, i32) {
    %c0_i32 = arith.constant 0 : i32
    %c0_i32_0 = arith.constant 0 : i32
    return %arg0, %c0_i32 : i32, i32
  }
}

</mosaic_0001>

<llo_original>
// kernel: tpu_custom_call.1
$region0: #{tpu_custom_call.1}
  #allocation0 [shape = 'u32[]', space=smem, size = 0x4, offset = 0x4, fixed_abs, tag = 'smem constant byte address 0x4 - core index']
  #allocation1 [shape = 'u32[144,128]{1,0:T(1,128)}', space=vmem, size = 0x12000, scoped, tag = 'internal scratch']
  %s0 = inlined_call_operand.hbm [shape: f32[1,2048], index: 0, kind: input, shape index: {}]
  %s1 = inlined_call_operand.hbm [shape: f32[1,2048], index: 1, kind: output, shape index: {}]
  %s2 = sld [smem:[#allocation0]]
  $region18: #{tpu_custom_call.1} parent=0
    _
  %s4 = ssub.s32 1, %s2
  %s5 = scalar_select 0, %s4, %s2
  $region1: #{tpu_custom_call.1} parent=0
    #allocation2 [shape = 'u8[8192]{0}', space=vmem, size = 0x2000, scoped, tag = 'input window, operand 0, single buffered']
    #allocation3 [shape = 's32[1]{0}', space=sflag, size = 0x4, scoped, tag = 'scoped memory for tpu_custom_call.1']
    #allocation4 [shape = 's32[1]{0}', space=sflag, size = 0x4, scoped, tag = 'scoped memory for tpu_custom_call.1']
    #allocation5 [shape = 'u8[8192]{0}', space=vmem, size = 0x2000, scoped, tag = 'output window, operand 0, single buffered']
    %6 = vsyncpa [#allocation3], 0
    %7 = vsyncpa [#allocation4], 0
    // Predicated region
    $region2: #{tpu_custom_call.1} parent=1 // pred_check
      _
    $region3: #{tpu_custom_call.1} parent=1 // pred_check_branch
      %9 = sbr.rel (0) target = $region5
    $region4: #{tpu_custom_call.1} parent=1 // pred_region
      %s11 = ssub.s32 256, 256
      %12 = vsyncadd [#allocation3], %s11
      %s14 = sshll.u32 [#allocation2], 4
      %s15 = int_to_ptr.vmem [resolvable:$true] %s14
      %17 = dma.hbm_to_vmem [thread:$0]  %s0, 256, %s15, [#allocation3]
    $region5: #{tpu_custom_call.1} parent=1 // pred_fallthru
      _
    // Predicated region
    $region6: #{tpu_custom_call.1} parent=1 // pred_check
      _
    $region7: #{tpu_custom_call.1} parent=1 // pred_check_branch
      %19 = sbr.rel (0) target = $region9
    $region8: #{tpu_custom_call.1} parent=1 // pred_region
      %20 = dma.done [#allocation3], 256
    $region9: #{tpu_custom_call.1} parent=1 // pred_fallthru
      _
    %v21 = vld [vmem:[#allocation2] sm:$0xff]
    %v22 = vld [vmem:[#allocation2 + $0x8] sm:$0xff]
    %v23 = vmax.f32 %v21, 0.0
    %v24 = vmax.f32 %v22, 0.0
    %25 = vst [vmem:[#allocation5] sm:$0xff] %v23
    %26 = vst [vmem:[#allocation5 + $0x8] sm:$0xff] %v24
    // Predicated region
    $region10: #{tpu_custom_call.1} parent=1 // pred_check
      _
    $region11: #{tpu_custom_call.1} parent=1 // pred_check_branch
      %28 = sbr.rel (0) target = $region13
    $region12: #{tpu_custom_call.1} parent=1 // pred_region
      %s30 = ssub.s32 256, 256
      %31 = vsyncadd [#allocation4], %s30
      %s33 = sshll.u32 [#allocation5], 4
      %s34 = int_to_ptr.vmem [resolvable:$true] %s33
      %36 = dma.vmem_to_hbm [thread:$0]  %s34, 256, %s1, [#allocation4]
    $region13: #{tpu_custom_call.1} parent=1 // pred_fallthru
      _
    // Predicated region
    $region14: #{tpu_custom_call.1} parent=1 // pred_check
      _
    $region15: #{tpu_custom_call.1} parent=1 // pred_check_branch
      %38 = sbr.rel (0) target = $region17
    $region16: #{tpu_custom_call.1} parent=1 // pred_region
      %39 = dma.done [#allocation4], 256
    $region17: #{tpu_custom_call.1} parent=1 // pred_fallthru
      _
    %40 = vsyncpa [#allocation3], 1
    %41 = vsyncpa [#allocation4], 1

</llo_original>
